<compile_context>
chip_gen: v7x
topology: tpu7x:2x2x1
jax: 0.10.0
libtpu: 0.0.40
codegen_flags: <defaults>
</compile_context>

<pallas_src>
import math

import jax
import jax.numpy as jnp
from jax.experimental import pallas as pl
from jax.experimental.pallas import tpu as pltpu


def _round_up(x, m):
    return ((x + m - 1) // m) * m


def _tpu_info():
    try:
        return pltpu.get_tpu_info()
    except Exception:
        return None


def _num_tensorcores(info):
    """Best-effort TensorCore count (v7x has 2); default 1 if unknown."""
    if info is None:
        return 1
    for name in ("num_tensorcores", "tensorcore_count", "num_cores",
                 "core_count", "cores_per_chip"):
        v = getattr(info, name, None)
        if isinstance(v, int) and 1 <= v <= 16:
            return v
    return 1


def _vmem_capacity_bytes(info):
    if info is None:
        return None
    for name in ("vmem_capacity_bytes", "vmem_bytes", "vmem_size_bytes"):
        v = getattr(info, name, None)
        if isinstance(v, int) and v > (1 << 20):
            return v
    return None


def _make_kernel(K, pad, compute_dtype):
    """Fused 3x(conv1d 'same' + ReLU) on one lane-dense (C, T) slab."""

    def kernel(x_ref, m_ref, w1_ref, b1_ref, w2_ref, b2_ref, w3_ref, b3_ref,
               o_ref):
        T = x_ref.shape[-1]

        def conv_bias_relu(h, w_ref, b_ref):
            # im2col via K lane rotations stacked along sublanes -> (K*C, T).
            # Rolled-in (wrapped) columns are zero margins, so this exactly
            # reproduces Conv1d zero padding of width K//2.
            taps = []
            for t in range(K):
                shift = (pad - t) % T
                taps.append(h if shift == 0
                            else pltpu.roll(h, shift=shift, axis=1))
            slab = taps[0] if K == 1 else jnp.concatenate(taps, axis=0)
            y = jnp.dot(w_ref[...], slab,
                        preferred_element_type=jnp.float32)       # MXU
            return jnp.maximum(y + b_ref[...], 0.0)               # bias+ReLU f32

        mask = m_ref[...]                      # (1, T) 1/0 in compute dtype
        h = x_ref[...]
        # Layers 1-2: cast first, then re-zero margins with one cheap multiply
        # in the (packed) compute dtype so bias+ReLU garbage never leaks into
        # the next conv through the roll wraparound.
        h = conv_bias_relu(h, w1_ref, b1_ref).astype(compute_dtype) * mask
        h = conv_bias_relu(h, w2_ref, b2_ref).astype(compute_dtype) * mask
        # Layer 3: margins are sliced away in the wrapper, no mask needed.
        o_ref[...] = conv_bias_relu(h, w3_ref, b3_ref).astype(o_ref.dtype)

    return kernel


def _choose_layout(N, L, pad, *, target_lanes, min_step_lanes, n_cores,
                   vmem_cap, est_fn):
    """Pick (L_p, spt, N_p, n_steps, T, vmem_est).

    Constraints: L_p >= L + pad (zero margin wide enough for the roll trick)
    and T = spt * L_p a multiple of 128 (lane-dense 128-aligned blocks, and
    pltpu.roll stays on an aligned lane width).  Score: lanes processed per
    TensorCore, then total padded lanes, then step count.
    """
    seg_min = L + pad
    lo, hi = _round_up(seg_min, 8), _round_up(seg_min, 128)
    best_fit = best_any = None
    for L_p in range(lo, hi + 1, 8):
        unit = 128 // math.gcd(L_p, 128)      # spt granularity for T % 128 == 0
        spt_full = _round_up(N, unit)         # whole (padded) batch in one step
        spt_budget = max(unit, (target_lanes // (L_p * unit)) * unit)
        spt_opts = {min(spt_full, spt_budget), unit}
        if n_cores > 1 and N > 1:
            # Multi-TC chips: add a per-core split only if every step still
            # gets >= min_step_lanes lanes (never shrink tiles below that).
            spt_split = _round_up(-(-N // n_cores), unit)
            if spt_split * L_p >= min_step_lanes:
                spt_opts.add(min(spt_split, spt_full))
        for spt in spt_opts:
            N_p = _round_up(N, spt)
            n_steps = N_p // spt
            T = spt * L_p
            est = est_fn(T)
            lanes_per_core = -(-n_steps // n_cores) * T
            key = (lanes_per_core, N_p * L_p, n_steps, L_p)
            cand = (key, (L_p, spt, N_p, n_steps, T, est))
            if best_any is None or key < best_any[0]:
                best_any = cand
            if est <= vmem_cap and (best_fit is None or key < best_fit[0]):
                best_fit = cand
    return (best_fit or best_any)[1]


# Tri-state cache: does this JAX build accept pl.Buffered(1) (single-buffered
# invariant weights)?  None = unknown yet.
_single_buffer_ok = None


def conv1d_triple_res_block(x, params, *, compute_dtype=jnp.bfloat16,
                            out_dtype=None, target_lanes=2048,
                            min_step_lanes=512):
    """x: (N, Cin, L) -> (N, Cout, L).  params: w1,b1,w2,b2,w3,b3 (PyTorch shapes)."""
    global _single_buffer_ok

    N, Cin, L = x.shape
    w1, b1 = params["w1"], params["b1"]
    w2, b2 = params["w2"], params["b2"]
    w3, b3 = params["w3"], params["b3"]
    Cout, _, K = w1.shape
    assert K % 2 == 1, "padding=K//2 matches PyTorch 'same' only for odd kernels"
    pad = K // 2
    out_dtype = x.dtype if out_dtype is None else out_dtype

    # Channel padding to the sublane packing of the MXU input dtype.
    cdt_size = jnp.dtype(compute_dtype).itemsize
    out_size = jnp.dtype(out_dtype).itemsize
    c_mult = 8 * (4 // cdt_size)
    Cin_p, Cout_p = _round_up(Cin, c_mult), _round_up(Cout, c_mult)
    Cmax = max(Cin_p, Cout_p)

    # --- hardware-aware layout & VMEM budgeting -------------------------------
    info = _tpu_info()
    n_cores = _num_tensorcores(info)
    vmem_phys = _vmem_capacity_bytes(info)
    vmem_cap = int(0.75 * vmem_phys) if vmem_phys else (48 << 20)  # v7x-safe dflt

    w_bytes = (Cout_p * K * Cin_p + 2 * Cout_p * K * Cout_p) * cdt_size \
        + 3 * Cout_p * 4

    def est_fn(T):
        io = 2 * Cin_p * T * cdt_size + 2 * Cout_p * T * out_size  # dbl-buf blocks
        interm = (K * Cmax * T * cdt_size        # im2col slab
                  + Cout_p * T * 4               # f32 matmul result
                  + 2 * Cmax * T * 4)            # live activations / temps
        return io + 2 * w_bytes + interm         # 2x weights = worst case

    L_p, spt, N_p, n_steps, T, est = _choose_layout(
        N, L, pad, target_lanes=target_lanes, min_step_lanes=min_step_lanes,
        n_cores=n_cores, vmem_cap=vmem_cap, est_fn=est_fn)
    vmem_limit = int(min(vmem_cap, max(int(1.5 * est) + (4 << 20), 32 << 20)))

    # --- pack activations: (N, Cin, L) -> (Cin_p, N_p * L_p), lane-dense ------
    # NOTE(perf): this pad + transpose is an extra HBM copy; keep activations
    # in this packed layout across layers in the surrounding model to skip it.
    xq = jnp.pad(x, ((0, N_p - N), (0, Cin_p - Cin), (0, L_p - L)))
    xb = jnp.transpose(xq, (1, 0, 2)).reshape(Cin_p, N_p * L_p)
    xb = xb.astype(compute_dtype)

    # Lane-validity mask (1/0) in compute dtype: first L columns of each
    # L_p-wide segment are real data, the rest is zero margin / conv padding.
    lane_idx = jnp.arange(N_p * L_p, dtype=jnp.int32) % L_p
    mask = (lane_idx < L).astype(compute_dtype).reshape(1, N_p * L_p)

    # --- pre-pack weights: (Cout, Cin, K) -> (Cout_p, K * Cin_p) ---------------
    # Row t*Cin_p + c of the in-kernel im2col slab is channel c of tap t, so
    # w_packed[o, t*Cin_p + c] must equal w[o, c, t].
    def pack_w(w, cin_p):
        co, ci, k = w.shape
        wp = jnp.pad(w, ((0, Cout_p - co), (0, cin_p - ci), (0, 0)))
        return jnp.transpose(wp, (0, 2, 1)).reshape(
            Cout_p, k * cin_p).astype(compute_dtype)

    def pack_b(b):
        return jnp.pad(b.reshape(-1, 1).astype(jnp.float32),
                       ((0, Cout_p - b.shape[0]), (0, 0)))

    w1p, w2p, w3p = pack_w(w1, Cin_p), pack_w(w2, Cout_p), pack_w(w3, Cout_p)
    b1p, b2p, b3p = pack_b(b1), pack_b(b2), pack_b(b3)

    kernel = _make_kernel(K, pad, compute_dtype)

    def _fused_call(weight_mode):
        def wspec(shape):
            nd = len(shape)
            idx = lambda i, _nd=nd: (0,) * _nd
            if weight_mode is None:
                return pl.BlockSpec(shape, idx)
            return pl.BlockSpec(shape, idx, pipeline_mode=weight_mode)

        return pl.pallas_call(
            kernel,
            out_shape=jax.ShapeDtypeStruct((Cout_p, N_p * L_p), out_dtype),
            grid_spec=pltpu.PrefetchScalarGridSpec(
                num_scalar_prefetch=0,
                grid=(n_steps,),
                in_specs=[
                    pl.BlockSpec((Cin_p, T), lambda i: (0, i)),   # activations
                    pl.BlockSpec((1, T), lambda i: (0, i)),       # margin mask
                    wspec(w1p.shape), wspec(b1p.shape),           # resident wts
                    wspec(w2p.shape), wspec(b2p.shape),
                    wspec(w3p.shape), wspec(b3p.shape),
                ],
                out_specs=pl.BlockSpec((Cout_p, T), lambda i: (0, i)),
            ),
            compiler_params=pltpu.CompilerParams(
                dimension_semantics=("parallel",),   # sample-group axis
                vmem_limit_bytes=vmem_limit),
        )(xb, mask, w1p, b1p, w2p, b2p, w3p, b3p)

    # Invariant weights only need a single VMEM buffer (constant index_map);
    # fall back to default double-buffering if this build rejects Buffered(1).
    if _single_buffer_ok is None:
        try:
            yb = _fused_call(pl.Buffered(1))
            jax.block_until_ready(yb)
            _single_buffer_ok = True
        except Exception:
            _single_buffer_ok = False
            yb = _fused_call(None)
    elif _single_buffer_ok:
        yb = _fused_call(pl.Buffered(1))
    else:
        yb = _fused_call(None)

    # --- unpack: (Cout_p, N_p*L_p) -> (N, Cout, L) -----------------------------
    y = jnp.transpose(yb.reshape(Cout_p, N_p, L_p), (1, 0, 2))
    return y[:N, :Cout, :L]


def init_params(key, in_channels, out_channels, kernel_size):
    """Deterministic synthetic parameters (PyTorch Conv1d shapes, bias=True)."""
    ks = jax.random.split(key, 6)

    def wb(kw, kb, cin, cout):
        bound = 1.0 / (cin * kernel_size) ** 0.5
        w = jax.random.uniform(kw, (cout, cin, kernel_size),
                               minval=-bound, maxval=bound, dtype=jnp.float32)
        b = jax.random.uniform(kb, (cout,),
                               minval=-bound, maxval=bound, dtype=jnp.float32)
        return w, b

    w1, b1 = wb(ks[0], ks[1], in_channels, out_channels)
    w2, b2 = wb(ks[2], ks[3], out_channels, out_channels)
    w3, b3 = wb(ks[4], ks[5], out_channels, out_channels)
    return {"w1": w1, "b1": b1, "w2": w2, "b2": b2, "w3": w3, "b3": b3}


def _reference(x, params):
    """Plain-JAX reference (PyTorch Conv1d 'same' + ReLU, three layers)."""
    def layer(h, w, b):
        y = jax.lax.conv_general_dilated(
            h, w, window_strides=(1,), padding=[(w.shape[2] // 2,) * 2],
            dimension_numbers=("NCH", "OIH", "NCH"))
        return jax.nn.relu(y + b[None, :, None])

    h = layer(x, params["w1"], params["b1"])
    h = layer(h, params["w2"], params["b2"])
    return layer(h, params["w3"], params["b3"])


if __name__ == "__main__":
    key = jax.random.PRNGKey(0)
    k_x, k_p, k_x2 = jax.random.split(key, 3)

    N, C_IN, C_OUT, L, K = 2, 4, 8, 16, 3
    x = jax.random.normal(k_x, (N, C_IN, L), dtype=jnp.float32)
    params = init_params(k_p, C_IN, C_OUT, K)
    y_ref = _reference(x, params)

    # f32 MXU path: tight check against the plain-JAX reference.
    y_f32 = jax.block_until_ready(
        conv1d_triple_res_block(x, params, compute_dtype=jnp.float32))
    assert y_f32.shape == (N, C_OUT, L)
    assert float(jnp.max(jnp.abs(y_f32 - y_ref))) < 1e-4

    # Default bf16 MXU path (f32 accumulation): loose check.  Inter-layer
    # activations are bf16 here, which is the documented precision tradeoff.
    y_bf16 = jax.block_until_ready(conv1d_triple_res_block(x, params))
    assert y_bf16.shape == (N, C_OUT, L)
    tol = 5e-2 * (1.0 + float(jnp.max(jnp.abs(y_ref))))
    assert float(jnp.max(jnp.abs(y_bf16 - y_ref))) < tol

    # Multi-step grid path (several sample-groups per call), f32, tight check.
    N2 = 20
    x2 = jax.random.normal(k_x2, (N2, C_IN, L), dtype=jnp.float32)
    y2_ref = _reference(x2, params)
    y2 = jax.block_until_ready(
        conv1d_triple_res_block(x2, params, compute_dtype=jnp.float32,
                                target_lanes=256))
    assert y2.shape == (N2, C_OUT, L)
    assert float(jnp.max(jnp.abs(y2 - y2_ref))) < 1e-4

    print("KERNEL_OK")
</pallas_src>

<mosaic_0001>
module attributes {stable_mosaic.version = 11 : i64} {
  func.func @kernel(%arg0: i32, %arg1: memref<8x128xf32, #tpu.memory_space<vmem>>, %arg2: memref<1x128xf32, #tpu.memory_space<vmem>>, %arg3: memref<8x24xf32, #tpu.memory_space<vmem>>, %arg4: memref<8x1xf32, #tpu.memory_space<vmem>>, %arg5: memref<8x24xf32, #tpu.memory_space<vmem>>, %arg6: memref<8x1xf32, #tpu.memory_space<vmem>>, %arg7: memref<8x24xf32, #tpu.memory_space<vmem>>, %arg8: memref<8x1xf32, #tpu.memory_space<vmem>>, %arg9: memref<8x128xf32, #tpu.memory_space<vmem>>) attributes {dimension_semantics = [#tpu.dimension_semantics<parallel>], iteration_bounds = array<i64: 1>, scalar_prefetch = 0 : i64, scratch_operands = 0 : i64, tpu.core_type = #tpu.core_type<tc>, window_params = [{transform_indices = @transform_0, window_bounds = array<i64: 8, 128>}, {transform_indices = @transform_1, window_bounds = array<i64: 1, 128>}, {pipeline_mode = #tpu.pipeline_mode<synchronous>, transform_indices = @transform_2, window_bounds = array<i64: 8, 24>}, {pipeline_mode = #tpu.pipeline_mode<synchronous>, transform_indices = @transform_3, window_bounds = array<i64: 8, 1>}, {pipeline_mode = #tpu.pipeline_mode<synchronous>, transform_indices = @transform_4, window_bounds = array<i64: 8, 24>}, {pipeline_mode = #tpu.pipeline_mode<synchronous>, transform_indices = @transform_5, window_bounds = array<i64: 8, 1>}, {pipeline_mode = #tpu.pipeline_mode<synchronous>, transform_indices = @transform_6, window_bounds = array<i64: 8, 24>}, {pipeline_mode = #tpu.pipeline_mode<synchronous>, transform_indices = @transform_7, window_bounds = array<i64: 8, 1>}, {transform_indices = @transform_8, window_bounds = array<i64: 8, 128>}]} {
    %c0 = arith.constant 0 : index
    %c0_0 = arith.constant 0 : index
    %0 = vector.load %arg2[%c0, %c0_0] : memref<1x128xf32, #tpu.memory_space<vmem>>, vector<1x128xf32>
    %c0_1 = arith.constant 0 : index
    %c0_2 = arith.constant 0 : index
    %1 = vector.load %arg1[%c0_1, %c0_2] : memref<8x128xf32, #tpu.memory_space<vmem>>, vector<8x128xf32>
    %c1_i32 = arith.constant 1 : i32
    %2 = tpu.dynamic_rotate %1 by %c1_i32 dim 1 : vector<8x128xf32>, i32 -> vector<8x128xf32>
    %c127_i32 = arith.constant 127 : i32
    %3 = tpu.dynamic_rotate %1 by %c127_i32 dim 1 : vector<8x128xf32>, i32 -> vector<8x128xf32>
    %4 = tpu.concatenate %2, %1, %3 in 0 : vector<8x128xf32>, vector<8x128xf32>, vector<8x128xf32> -> vector<24x128xf32>
    %c0_3 = arith.constant 0 : index
    %c0_4 = arith.constant 0 : index
    %5 = vector.load %arg3[%c0_3, %c0_4] : memref<8x24xf32, #tpu.memory_space<vmem>>, vector<8x24xf32>
    %cst = arith.constant dense<0.000000e+00> : vector<8x128xf32>
    %6 = tpu.matmul %5, %4, %cst {dimension_numbers = #tpu.dot_dimension_numbers<[1], [0], [0], [1], [0, 0, 1, 1], [], []>} : vector<8x24xf32>, vector<24x128xf32>, vector<8x128xf32> -> vector<8x128xf32>
    %c0_5 = arith.constant 0 : index
    %c0_6 = arith.constant 0 : index
    %7 = vector.load %arg4[%c0_5, %c0_6] : memref<8x1xf32, #tpu.memory_space<vmem>>, vector<8x1xf32>
    %8 = vector.broadcast %7 : vector<8x1xf32> to vector<8x128xf32>
    %9 = arith.addf %6, %8 : vector<8x128xf32>
    %cst_7 = arith.constant 0.000000e+00 : f32
    %10 = vector.broadcast %cst_7 : f32 to vector<8x128xf32>
    %11 = arith.maximumf %9, %10 : vector<8x128xf32>
    %12 = vector.broadcast %0 : vector<1x128xf32> to vector<8x128xf32>
    %13 = arith.mulf %11, %12 : vector<8x128xf32>
    %c1_i32_8 = arith.constant 1 : i32
    %14 = tpu.dynamic_rotate %13 by %c1_i32_8 dim 1 : vector<8x128xf32>, i32 -> vector<8x128xf32>
    %c127_i32_9 = arith.constant 127 : i32
    %15 = tpu.dynamic_rotate %13 by %c127_i32_9 dim 1 : vector<8x128xf32>, i32 -> vector<8x128xf32>
    %16 = tpu.concatenate %14, %13, %15 in 0 : vector<8x128xf32>, vector<8x128xf32>, vector<8x128xf32> -> vector<24x128xf32>
    %c0_10 = arith.constant 0 : index
    %c0_11 = arith.constant 0 : index
    %17 = vector.load %arg5[%c0_10, %c0_11] : memref<8x24xf32, #tpu.memory_space<vmem>>, vector<8x24xf32>
    %cst_12 = arith.constant dense<0.000000e+00> : vector<8x128xf32>
    %18 = tpu.matmul %17, %16, %cst_12 {dimension_numbers = #tpu.dot_dimension_numbers<[1], [0], [0], [1], [0, 0, 1, 1], [], []>} : vector<8x24xf32>, vector<24x128xf32>, vector<8x128xf32> -> vector<8x128xf32>
    %c0_13 = arith.constant 0 : index
    %c0_14 = arith.constant 0 : index
    %19 = vector.load %arg6[%c0_13, %c0_14] : memref<8x1xf32, #tpu.memory_space<vmem>>, vector<8x1xf32>
    %20 = vector.broadcast %19 : vector<8x1xf32> to vector<8x128xf32>
    %21 = arith.addf %18, %20 : vector<8x128xf32>
    %cst_15 = arith.constant 0.000000e+00 : f32
    %22 = vector.broadcast %cst_15 : f32 to vector<8x128xf32>
    %23 = arith.maximumf %21, %22 : vector<8x128xf32>
    %24 = vector.broadcast %0 : vector<1x128xf32> to vector<8x128xf32>
    %25 = arith.mulf %23, %24 : vector<8x128xf32>
    %c1_i32_16 = arith.constant 1 : i32
    %26 = tpu.dynamic_rotate %25 by %c1_i32_16 dim 1 : vector<8x128xf32>, i32 -> vector<8x128xf32>
    %c127_i32_17 = arith.constant 127 : i32
    %27 = tpu.dynamic_rotate %25 by %c127_i32_17 dim 1 : vector<8x128xf32>, i32 -> vector<8x128xf32>
    %28 = tpu.concatenate %26, %25, %27 in 0 : vector<8x128xf32>, vector<8x128xf32>, vector<8x128xf32> -> vector<24x128xf32>
    %c0_18 = arith.constant 0 : index
    %c0_19 = arith.constant 0 : index
    %29 = vector.load %arg7[%c0_18, %c0_19] : memref<8x24xf32, #tpu.memory_space<vmem>>, vector<8x24xf32>
    %cst_20 = arith.constant dense<0.000000e+00> : vector<8x128xf32>
    %30 = tpu.matmul %29, %28, %cst_20 {dimension_numbers = #tpu.dot_dimension_numbers<[1], [0], [0], [1], [0, 0, 1, 1], [], []>} : vector<8x24xf32>, vector<24x128xf32>, vector<8x128xf32> -> vector<8x128xf32>
    %c0_21 = arith.constant 0 : index
    %c0_22 = arith.constant 0 : index
    %31 = vector.load %arg8[%c0_21, %c0_22] : memref<8x1xf32, #tpu.memory_space<vmem>>, vector<8x1xf32>
    %32 = vector.broadcast %31 : vector<8x1xf32> to vector<8x128xf32>
    %33 = arith.addf %30, %32 : vector<8x128xf32>
    %cst_23 = arith.constant 0.000000e+00 : f32
    %34 = vector.broadcast %cst_23 : f32 to vector<8x128xf32>
    %35 = arith.maximumf %33, %34 : vector<8x128xf32>
    %c0_24 = arith.constant 0 : index
    %c0_25 = arith.constant 0 : index
    %36 = vector.load %arg9[%c0_24, %c0_25] : memref<8x128xf32, #tpu.memory_space<vmem>>, vector<8x128xf32>
    tpu.vector_store %arg9[%c0_24, %c0_25], %35 {strides = array<i32>} : memref<8x128xf32, #tpu.memory_space<vmem>>, vector<8x128xf32>,
    return
  }
  func.func @transform_0(%arg0: i32) -> (i32, i32) {
    %c0_i32 = arith.constant 0 : i32
    %c0_i32_0 = arith.constant 0 : i32
    return %c0_i32, %arg0 : i32, i32
  }
  func.func @transform_1(%arg0: i32) -> (i32, i32) {
    %c0_i32 = arith.constant 0 : i32
    %c0_i32_0 = arith.constant 0 : i32
    return %c0_i32, %arg0 : i32, i32
  }
  func.func @transform_2(%arg0: i32) -> (i32, i32) {
    %c0_i32 = arith.constant 0 : i32
    %c0_i32_0 = arith.constant 0 : i32
    %c0_i32_1 = arith.constant 0 : i32
    return %c0_i32, %c0_i32_0 : i32, i32
  }
  func.func @transform_3(%arg0: i32) -> (i32, i32) {
    %c0_i32 = arith.constant 0 : i32
    %c0_i32_0 = arith.constant 0 : i32
    %c0_i32_1 = arith.constant 0 : i32
    return %c0_i32, %c0_i32_0 : i32, i32
  }
  func.func @transform_4(%arg0: i32) -> (i32, i32) {
    %c0_i32 = arith.constant 0 : i32
    %c0_i32_0 = arith.constant 0 : i32
    %c0_i32_1 = arith.constant 0 : i32
    return %c0_i32, %c0_i32_0 : i32, i32
  }
  func.func @transform_5(%arg0: i32) -> (i32, i32) {
    %c0_i32 = arith.constant 0 : i32
    %c0_i32_0 = arith.constant 0 : i32
    %c0_i32_1 = arith.constant 0 : i32
    return %c0_i32, %c0_i32_0 : i32, i32
  }
  func.func @transform_6(%arg0: i32) -> (i32, i32) {
    %c0_i32 = arith.constant 0 : i32
    %c0_i32_0 = arith.constant 0 : i32
    %c0_i32_1 = arith.constant 0 : i32
    return %c0_i32, %c0_i32_0 : i32, i32
  }
  func.func @transform_7(%arg0: i32) -> (i32, i32) {
    %c0_i32 = arith.constant 0 : i32
    %c0_i32_0 = arith.constant 0 : i32
    %c0_i32_1 = arith.constant 0 : i32
    return %c0_i32, %c0_i32_0 : i32, i32
  }
  func.func @transform_8(%arg0: i32) -> (i32, i32) {
    %c0_i32 = arith.constant 0 : i32
    %c0_i32_0 = arith.constant 0 : i32
    return %c0_i32, %arg0 : i32, i32
  }
}

module attributes {stable_mosaic.version = 11 : i64} {
  func.func @kernel(%arg0: i32, %arg1: memref<8x128xf32, #tpu.memory_space<vmem>>, %arg2: memref<1x128xf32, #tpu.memory_space<vmem>>, %arg3: memref<8x24xf32, #tpu.memory_space<vmem>>, %arg4: memref<8x1xf32, #tpu.memory_space<vmem>>, %arg5: memref<8x24xf32, #tpu.memory_space<vmem>>, %arg6: memref<8x1xf32, #tpu.memory_space<vmem>>, %arg7: memref<8x24xf32, #tpu.memory_space<vmem>>, %arg8: memref<8x1xf32, #tpu.memory_space<vmem>>, %arg9: memref<8x128xf32, #tpu.memory_space<vmem>>) attributes {dimension_semantics = [#tpu.dimension_semantics<parallel>], iteration_bounds = array<i64: 1>, scalar_prefetch = 0 : i64, scratch_operands = 0 : i64, tpu.core_type = #tpu.core_type<tc>, window_params = [{transform_indices = @transform_0, window_bounds = array<i64: 8, 128>}, {transform_indices = @transform_1, window_bounds = array<i64: 1, 128>}, {pipeline_mode = #tpu.pipeline_mode<synchronous>, transform_indices = @transform_2, window_bounds = array<i64: 8, 24>}, {pipeline_mode = #tpu.pipeline_mode<synchronous>, transform_indices = @transform_3, window_bounds = array<i64: 8, 1>}, {pipeline_mode = #tpu.pipeline_mode<synchronous>, transform_indices = @transform_4, window_bounds = array<i64: 8, 24>}, {pipeline_mode = #tpu.pipeline_mode<synchronous>, transform_indices = @transform_5, window_bounds = array<i64: 8, 1>}, {pipeline_mode = #tpu.pipeline_mode<synchronous>, transform_indices = @transform_6, window_bounds = array<i64: 8, 24>}, {pipeline_mode = #tpu.pipeline_mode<synchronous>, transform_indices = @transform_7, window_bounds = array<i64: 8, 1>}, {transform_indices = @transform_8, window_bounds = array<i64: 8, 128>}]} {
    %c0 = arith.constant 0 : index
    %c0_0 = arith.constant 0 : index
    %0 = vector.load %arg2[%c0, %c0_0] : memref<1x128xf32, #tpu.memory_space<vmem>>, vector<1x128xf32>
    %c0_1 = arith.constant 0 : index
    %c0_2 = arith.constant 0 : index
    %1 = vector.load %arg1[%c0_1, %c0_2] : memref<8x128xf32, #tpu.memory_space<vmem>>, vector<8x128xf32>
    %c1_i32 = arith.constant 1 : i32
    %2 = tpu.dynamic_rotate %1 by %c1_i32 dim 1 : vector<8x128xf32>, i32 -> vector<8x128xf32>
    %c127_i32 = arith.constant 127 : i32
    %3 = tpu.dynamic_rotate %1 by %c127_i32 dim 1 : vector<8x128xf32>, i32 -> vector<8x128xf32>
    %4 = tpu.concatenate %2, %1, %3 in 0 : vector<8x128xf32>, vector<8x128xf32>, vector<8x128xf32> -> vector<24x128xf32>
    %c0_3 = arith.constant 0 : index
    %c0_4 = arith.constant 0 : index
    %5 = vector.load %arg3[%c0_3, %c0_4] : memref<8x24xf32, #tpu.memory_space<vmem>>, vector<8x24xf32>
    %cst = arith.constant dense<0.000000e+00> : vector<8x128xf32>
    %6 = tpu.matmul %5, %4, %cst {dimension_numbers = #tpu.dot_dimension_numbers<[1], [0], [0], [1], [0, 0, 1, 1], [], []>} : vector<8x24xf32>, vector<24x128xf32>, vector<8x128xf32> -> vector<8x128xf32>
    %c0_5 = arith.constant 0 : index
    %c0_6 = arith.constant 0 : index
    %7 = vector.load %arg4[%c0_5, %c0_6] : memref<8x1xf32, #tpu.memory_space<vmem>>, vector<8x1xf32>
    %8 = vector.broadcast %7 : vector<8x1xf32> to vector<8x128xf32>
    %9 = arith.addf %6, %8 : vector<8x128xf32>
    %cst_7 = arith.constant 0.000000e+00 : f32
    %10 = vector.broadcast %cst_7 : f32 to vector<8x128xf32>
    %11 = arith.maximumf %9, %10 : vector<8x128xf32>
    %12 = vector.broadcast %0 : vector<1x128xf32> to vector<8x128xf32>
    %13 = arith.mulf %11, %12 : vector<8x128xf32>
    %c1_i32_8 = arith.constant 1 : i32
    %14 = tpu.dynamic_rotate %13 by %c1_i32_8 dim 1 : vector<8x128xf32>, i32 -> vector<8x128xf32>
    %c127_i32_9 = arith.constant 127 : i32
    %15 = tpu.dynamic_rotate %13 by %c127_i32_9 dim 1 : vector<8x128xf32>, i32 -> vector<8x128xf32>
    %16 = tpu.concatenate %14, %13, %15 in 0 : vector<8x128xf32>, vector<8x128xf32>, vector<8x128xf32> -> vector<24x128xf32>
    %c0_10 = arith.constant 0 : index
    %c0_11 = arith.constant 0 : index
    %17 = vector.load %arg5[%c0_10, %c0_11] : memref<8x24xf32, #tpu.memory_space<vmem>>, vector<8x24xf32>
    %cst_12 = arith.constant dense<0.000000e+00> : vector<8x128xf32>
    %18 = tpu.matmul %17, %16, %cst_12 {dimension_numbers = #tpu.dot_dimension_numbers<[1], [0], [0], [1], [0, 0, 1, 1], [], []>} : vector<8x24xf32>, vector<24x128xf32>, vector<8x128xf32> -> vector<8x128xf32>
    %c0_13 = arith.constant 0 : index
    %c0_14 = arith.constant 0 : index
    %19 = vector.load %arg6[%c0_13, %c0_14] : memref<8x1xf32, #tpu.memory_space<vmem>>, vector<8x1xf32>
    %20 = vector.broadcast %19 : vector<8x1xf32> to vector<8x128xf32>
    %21 = arith.addf %18, %20 : vector<8x128xf32>
    %cst_15 = arith.constant 0.000000e+00 : f32
    %22 = vector.broadcast %cst_15 : f32 to vector<8x128xf32>
    %23 = arith.maximumf %21, %22 : vector<8x128xf32>
    %24 = vector.broadcast %0 : vector<1x128xf32> to vector<8x128xf32>
    %25 = arith.mulf %23, %24 : vector<8x128xf32>
    %c1_i32_16 = arith.constant 1 : i32
    %26 = tpu.dynamic_rotate %25 by %c1_i32_16 dim 1 : vector<8x128xf32>, i32 -> vector<8x128xf32>
    %c127_i32_17 = arith.constant 127 : i32
    %27 = tpu.dynamic_rotate %25 by %c127_i32_17 dim 1 : vector<8x128xf32>, i32 -> vector<8x128xf32>
    %28 = tpu.concatenate %26, %25, %27 in 0 : vector<8x128xf32>, vector<8x128xf32>, vector<8x128xf32> -> vector<24x128xf32>
    %c0_18 = arith.constant 0 : index
    %c0_19 = arith.constant 0 : index
    %29 = vector.load %arg7[%c0_18, %c0_19] : memref<8x24xf32, #tpu.memory_space<vmem>>, vector<8x24xf32>
    %cst_20 = arith.constant dense<0.000000e+00> : vector<8x128xf32>
    %30 = tpu.matmul %29, %28, %cst_20 {dimension_numbers = #tpu.dot_dimension_numbers<[1], [0], [0], [1], [0, 0, 1, 1], [], []>} : vector<8x24xf32>, vector<24x128xf32>, vector<8x128xf32> -> vector<8x128xf32>
    %c0_21 = arith.constant 0 : index
    %c0_22 = arith.constant 0 : index
    %31 = vector.load %arg8[%c0_21, %c0_22] : memref<8x1xf32, #tpu.memory_space<vmem>>, vector<8x1xf32>
    %32 = vector.broadcast %31 : vector<8x1xf32> to vector<8x128xf32>
    %33 = arith.addf %30, %32 : vector<8x128xf32>
    %cst_23 = arith.constant 0.000000e+00 : f32
    %34 = vector.broadcast %cst_23 : f32 to vector<8x128xf32>
    %35 = arith.maximumf %33, %34 : vector<8x128xf32>
    %c0_24 = arith.constant 0 : index
    %c0_25 = arith.constant 0 : index
    %36 = vector.load %arg9[%c0_24, %c0_25] : memref<8x128xf32, #tpu.memory_space<vmem>>, vector<8x128xf32>
    tpu.vector_store %arg9[%c0_24, %c0_25], %35 {strides = array<i32>} : memref<8x128xf32, #tpu.memory_space<vmem>>, vector<8x128xf32>,
    return
  }
  func.func @transform_0(%arg0: i32) -> (i32, i32) {
    %c0_i32 = arith.constant 0 : i32
    %c0_i32_0 = arith.constant 0 : i32
    return %c0_i32, %arg0 : i32, i32
  }
  func.func @transform_1(%arg0: i32) -> (i32, i32) {
    %c0_i32 = arith.constant 0 : i32
    %c0_i32_0 = arith.constant 0 : i32
    return %c0_i32, %arg0 : i32, i32
  }
  func.func @transform_2(%arg0: i32) -> (i32, i32) {
    %c0_i32 = arith.constant 0 : i32
    %c0_i32_0 = arith.constant 0 : i32
    %c0_i32_1 = arith.constant 0 : i32
    return %c0_i32, %c0_i32_0 : i32, i32
  }
  func.func @transform_3(%arg0: i32) -> (i32, i32) {
    %c0_i32 = arith.constant 0 : i32
    %c0_i32_0 = arith.constant 0 : i32
    %c0_i32_1 = arith.constant 0 : i32
    return %c0_i32, %c0_i32_0 : i32, i32
  }
  func.func @transform_4(%arg0: i32) -> (i32, i32) {
    %c0_i32 = arith.constant 0 : i32
    %c0_i32_0 = arith.constant 0 : i32
    %c0_i32_1 = arith.constant 0 : i32
    return %c0_i32, %c0_i32_0 : i32, i32
  }
  func.func @transform_5(%arg0: i32) -> (i32, i32) {
    %c0_i32 = arith.constant 0 : i32
    %c0_i32_0 = arith.constant 0 : i32
    %c0_i32_1 = arith.constant 0 : i32
    return %c0_i32, %c0_i32_0 : i32, i32
  }
  func.func @transform_6(%arg0: i32) -> (i32, i32) {
    %c0_i32 = arith.constant 0 : i32
    %c0_i32_0 = arith.constant 0 : i32
    %c0_i32_1 = arith.constant 0 : i32
    return %c0_i32, %c0_i32_0 : i32, i32
  }
  func.func @transform_7(%arg0: i32) -> (i32, i32) {
    %c0_i32 = arith.constant 0 : i32
    %c0_i32_0 = arith.constant 0 : i32
    %c0_i32_1 = arith.constant 0 : i32
    return %c0_i32, %c0_i32_0 : i32, i32
  }
  func.func @transform_8(%arg0: i32) -> (i32, i32) {
    %c0_i32 = arith.constant 0 : i32
    %c0_i32_0 = arith.constant 0 : i32
    return %c0_i32, %arg0 : i32, i32
  }
}

</mosaic_0001>

<llo_original>
// kernel: tpu_custom_call.1
$region0: #{tpu_custom_call.1}
  #allocation0 [shape = 'u32[]', space=smem, size = 0x4, offset = 0x4, fixed_abs, tag = 'smem constant byte address 0x4 - core index']
  #allocation1 [shape = 'u32[144,128]{1,0:T(1,128)}', space=vmem, size = 0x12000, scoped, tag = 'internal scratch']
  %s0 = inlined_call_operand.vmem [shape: f32[8,128], index: 0, kind: input, shape index: {}]
  %s1 = inlined_call_operand.vmem [shape: f32[1,128], index: 1, kind: input, shape index: {}]
  %s2 = inlined_call_operand.vmem [shape: f32[8,24], index: 2, kind: input, shape index: {}]
  %s3 = inlined_call_operand.vmem [shape: f32[8,1], index: 3, kind: input, shape index: {}]
  %s4 = inlined_call_operand.vmem [shape: f32[8,24], index: 4, kind: input, shape index: {}]
  %s5 = inlined_call_operand.vmem [shape: f32[8,1], index: 5, kind: input, shape index: {}]
  %s6 = inlined_call_operand.vmem [shape: f32[8,24], index: 6, kind: input, shape index: {}]
  %s7 = inlined_call_operand.vmem [shape: f32[8,1], index: 7, kind: input, shape index: {}]
  %s8 = inlined_call_operand.hbm [shape: f32[8,128], index: 8, kind: output, shape index: {}]
  %s9 = sld [smem:[#allocation0]]
  $region42: #{tpu_custom_call.1} parent=0
    _
  %s11 = ssub.s32 1, %s9
  %s12 = scalar_select 0, %s11, %s9
  $region1: #{tpu_custom_call.1} parent=0
    #allocation2 [shape = 'u8[4096]{0}', space=vmem, size = 0x1000, scoped, tag = 'output window, operand 0, single buffered']
    #allocation3 [shape = 's32[1]{0}', space=sflag, size = 0x4, scoped, tag = 'scoped memory for tpu_custom_call.1']
    %13 = vsyncpa [#allocation3], 0
    // Predicated region
    $region2: #{tpu_custom_call.1} parent=1 // pred_check
      _
    $region3: #{tpu_custom_call.1} parent=1 // pred_check_branch
      %15 = sbr.rel (0) target = $region5
    $region4: #{tpu_custom_call.1} parent=1 // pred_region
      _
    $region5: #{tpu_custom_call.1} parent=1 // pred_fallthru
      _
    // Predicated region
    $region6: #{tpu_custom_call.1} parent=1 // pred_check
      _
    $region7: #{tpu_custom_call.1} parent=1 // pred_check_branch
      %17 = sbr.rel (0) target = $region9
    $region8: #{tpu_custom_call.1} parent=1 // pred_region
      _
    $region9: #{tpu_custom_call.1} parent=1 // pred_fallthru
      _
    // Predicated region
    $region10: #{tpu_custom_call.1} parent=1 // pred_check
      _
    $region11: #{tpu_custom_call.1} parent=1 // pred_check_branch
      %19 = sbr.rel (0) target = $region13
    $region12: #{tpu_custom_call.1} parent=1 // pred_region
      _
    $region13: #{tpu_custom_call.1} parent=1 // pred_fallthru
      _
    // Predicated region
    $region14: #{tpu_custom_call.1} parent=1 // pred_check
      _
    $region15: #{tpu_custom_call.1} parent=1 // pred_check_branch
      %21 = sbr.rel (0) target = $region17
    $region16: #{tpu_custom_call.1} parent=1 // pred_region
      _
    $region17: #{tpu_custom_call.1} parent=1 // pred_fallthru
      _
    // Predicated region
    $region18: #{tpu_custom_call.1} parent=1 // pred_check
      _
    $region19: #{tpu_custom_call.1} parent=1 // pred_check_branch
      %23 = sbr.rel (0) target = $region21
    $region20: #{tpu_custom_call.1} parent=1 // pred_region
      _
    $region21: #{tpu_custom_call.1} parent=1 // pred_fallthru
      _
    // Predicated region
    $region22: #{tpu_custom_call.1} parent=1 // pred_check
      _
    $region23: #{tpu_custom_call.1} parent=1 // pred_check_branch
      %25 = sbr.rel (0) target = $region25
    $region24: #{tpu_custom_call.1} parent=1 // pred_region
      _
    $region25: #{tpu_custom_call.1} parent=1 // pred_fallthru
      _
    // Predicated region
    $region26: #{tpu_custom_call.1} parent=1 // pred_check
      _
    $region27: #{tpu_custom_call.1} parent=1 // pred_check_branch
      %27 = sbr.rel (0) target = $region29
    $region28: #{tpu_custom_call.1} parent=1 // pred_region
      _
    $region29: #{tpu_custom_call.1} parent=1 // pred_fallthru
      _
    // Predicated region
    $region30: #{tpu_custom_call.1} parent=1 // pred_check
      _
    $region31: #{tpu_custom_call.1} parent=1 // pred_check_branch
      %29 = sbr.rel (0) target = $region33
    $region32: #{tpu_custom_call.1} parent=1 // pred_region
      _
    $region33: #{tpu_custom_call.1} parent=1 // pred_fallthru
      _
    %v30 = vld [vmem:[%s1] sm:$0x1]
    %v31 = vld [vmem:[%s0] sm:$0xff]
    %32 = vrot.lane.b32.xlu0 %v31, 1
    %v33 = vpop.permute.xlu0 %32
    %34 = vrot.lane.b32.xlu0 %v31, 127
    %v35 = vpop.permute.xlu0 %34
    %v36 = vld [vmem:[%s2] sm:$0xff]
    %v37 = vld [vmem:[%s3] sm:$0xff]
    %39 = vset.pattern.permute.xlu0 0
    %40 = vperm.xlu0 %39, %v37
    %v41 = vpop.permute.xlu0 %40
    %vm43 = vcmask 195584
    %v45 = vsel %vm43, %v36, 0
    %47 = vmatprep.subr.mxu0 0.0
    %48 = vmatpush1.msra.mxu0 %v33
    %49 = vmatprep.subr.mxu0 0.0
    %50 = vmatpush1.msra.mxu0 %v31
    %51 = vmatprep.subr.mxu0 0.0
    %52 = vmatpush1.msra.mxu0 %v35
    %53 = vmatprep.subr.mxu0 0.0
    %54 = vmatpush1.msra.mxu0 0.0
    %55 = vmatprep.subr.mxu0 0.0
    %56 = vmatpush1.msra.mxu0 0.0
    %57 = vmatprep.subr.mxu0 0.0
    %58 = vmatpush1.msra.mxu0 0.0
    %59 = vmatprep.subr.mxu0 0.0
    %60 = vmatpush1.msra.mxu0 0.0
    %61 = vmatprep.subr.mxu0 0.0
    %62 = vmatpush1.msra.mxu0 0.0
    %63 = vmatprep.subr.mxu0 0.0
    %64 = vmatpush1.msra.mxu0 0.0
    %65 = vmatprep.subr.mxu0 0.0
    %66 = vmatpush1.msra.mxu0 0.0
    %67 = vmatprep.subr.mxu0 0.0
    %68 = vmatpush1.msra.mxu0 0.0
    %69 = vmatprep.subr.mxu0 0.0
    %70 = vmatpush1.msra.mxu0 0.0
    %71 = vmatprep.subr.mxu0 0.0
    %72 = vmatpush1.msra.mxu0 0.0
    %73 = vmatprep.subr.mxu0 0.0
    %74 = vmatpush1.msra.mxu0 0.0
    %75 = vmatprep.subr.mxu0 0.0
    %76 = vmatpush1.msra.mxu0 0.0
    %77 = vmatprep.subr.mxu0 0.0
    %78 = vmatpush1.msra.mxu0 0.0
    %79 = vmatprep.subr.mxu0 0.0
    %80 = vmatpush1.msra.mxu0 0.0
    %81 = vmatprep.subr.mxu0 0.0
    %82 = vmatpush1.msra.mxu0 0.0
    %83 = vmatprep.subr.mxu0 0.0
    %84 = vmatpush1.msra.mxu0 0.0
    %85 = vmatprep.subr.mxu0 0.0
    %86 = vmatpush1.msra.mxu0 0.0
    %87 = vmatprep.subr.mxu0 0.0
    %88 = vmatpush1.msra.mxu0 0.0
    %89 = vmatprep.subr.mxu0 0.0
    %90 = vmatpush1.msra.mxu0 0.0
    %91 = vmatprep.subr.mxu0 0.0
    %92 = vmatpush1.msra.mxu0 0.0
    %93 = vmatprep.subr.mxu0 0.0
    %94 = vmatpush1.msra.mxu0 0.0
    %95 = vmatprep.subr.mxu0 0.0
    %96 = vmatpush1.msra.mxu0 0.0
    %97 = vmatprep.subr.mxu0 0.0
    %98 = vmatpush1.msra.mxu0 0.0
    %99 = vmatprep.subr.mxu0 0.0
    %100 = vmatpush1.msra.mxu0 0.0
    %101 = vmatprep.subr.mxu0 0.0
    %102 = vmatpush1.msra.mxu0 0.0
    %103 = vmatprep.subr.mxu0 0.0
    %104 = vmatpush1.msra.mxu0 0.0
    %105 = vmatprep.subr.mxu0 0.0
    %106 = vmatpush1.msra.mxu0 0.0
    %107 = vmatprep.subr.mxu0 0.0
    %108 = vmatpush1.msra.mxu0 0.0
    %109 = vmatprep.subr.mxu0 0.0
    %110 = vmatpush1.msra.mxu0 0.0
    %111 = vmatprep.mubr.f32.mxu0 0.0
    %112 = vmatmul.mubr.f32.gmra.mrb[0].mxu0 %v45
    %v113 = vpop.f32.mrb[0].mxu0
    %v114 = vadd.f32 %v41, %v113
    %v115 = vpop.f32.mrb[0].mxu0
    %116 = vdwg.mxu0
    %v117 = vmax.f32 %v114, 0.0
    %v119 = vlaneseq
    %v120 = vshrl.u32 %v119, 7
    %v121 = vsub.s32 0, %v120
    %v122 = vrot.slane %v30, %v121
    %v124 = vmul.f32 %v117, %v122
    %125 = vrot.lane.b32.xlu0 %v124, 1
    %v126 = vpop.permute.xlu0 %125
    %127 = vrot.lane.b32.xlu0 %v124, 127
    %v128 = vpop.permute.xlu0 %127
    %v129 = vld [vmem:[%s4] sm:$0xff]
    %v130 = vld [vmem:[%s5] sm:$0xff]
    %132 = vset.pattern.permute.xlu0 0
    %133 = vperm.xlu0 %132, %v130
    %v134 = vpop.permute.xlu0 %133
    %v137 = vsel %vm43, %v129, 0
    %139 = vmatprep.subr.mxu0 0.0
    %140 = vmatpush1.msra.mxu0 %v126
    %141 = vmatprep.subr.mxu0 0.0
    %142 = vmatpush1.msra.mxu0 %v124
    %143 = vmatprep.subr.mxu0 0.0
    %144 = vmatpush1.msra.mxu0 %v128
    %145 = vmatprep.subr.mxu0 0.0
    %146 = vmatpush1.msra.mxu0 0.0
    %147 = vmatprep.subr.mxu0 0.0
    %148 = vmatpush1.msra.mxu0 0.0
    %149 = vmatprep.subr.mxu0 0.0
    %150 = vmatpush1.msra.mxu0 0.0
    %151 = vmatprep.subr.mxu0 0.0
    %152 = vmatpush1.msra.mxu0 0.0
    %153 = vmatprep.subr.mxu0 0.0
    %154 = vmatpush1.msra.mxu0 0.0
    %155 = vmatprep.subr.mxu0 0.0
    %156 = vmatpush1.msra.mxu0 0.0
    %157 = vmatprep.subr.mxu0 0.0
    %158 = vmatpush1.msra.mxu0 0.0
    %159 = vmatprep.subr.mxu0 0.0
    %160 = vmatpush1.msra.mxu0 0.0
    %161 = vmatprep.subr.mxu0 0.0
    %162 = vmatpush1.msra.mxu0 0.0
    %163 = vmatprep.subr.mxu0 0.0
    %164 = vmatpush1.msra.mxu0 0.0
    %165 = vmatprep.subr.mxu0 0.0
    %166 = vmatpush1.msra.mxu0 0.0
    %167 = vmatprep.subr.mxu0 0.0
    %168 = vmatpush1.msra.mxu0 0.0
    %169 = vmatprep.subr.mxu0 0.0
    %170 = vmatpush1.msra.mxu0 0.0
    %171 = vmatprep.subr.mxu0 0.0
    %172 = vmatpush1.msra.mxu0 0.0
    %173 = vmatprep.subr.mxu0 0.0
    %174 = vmatpush1.msra.mxu0 0.0
    %175 = vmatprep.subr.mxu0 0.0
    %176 = vmatpush1.msra.mxu0 0.0
    %177 = vmatprep.subr.mxu0 0.0
    %178 = vmatpush1.msra.mxu0 0.0
    %179 = vmatprep.subr.mxu0 0.0
    %180 = vmatpush1.msra.mxu0 0.0
    %181 = vmatprep.subr.mxu0 0.0
    %182 = vmatpush1.msra.mxu0 0.0
    %183 = vmatprep.subr.mxu0 0.0
    %184 = vmatpush1.msra.mxu0 0.0
    %185 = vmatprep.subr.mxu0 0.0
    %186 = vmatpush1.msra.mxu0 0.0
    %187 = vmatprep.subr.mxu0 0.0
    %188 = vmatpush1.msra.mxu0 0.0
    %189 = vmatprep.subr.mxu0 0.0
    %190 = vmatpush1.msra.mxu0 0.0
    %191 = vmatprep.subr.mxu0 0.0
    %192 = vmatpush1.msra.mxu0 0.0
    %193 = vmatprep.subr.mxu0 0.0
    %194 = vmatpush1.msra.mxu0 0.0
    %195 = vmatprep.subr.mxu0 0.0
    %196 = vmatpush1.msra.mxu0 0.0
    %197 = vmatprep.subr.mxu0 0.0
    %198 = vmatpush1.msra.mxu0 0.0
    %199 = vmatprep.subr.mxu0 0.0
    %200 = vmatpush1.msra.mxu0 0.0
    %201 = vmatprep.subr.mxu0 0.0
    %202 = vmatpush1.msra.mxu0 0.0
    %203 = vmatprep.mubr.f32.mxu0 0.0
    %204 = vmatmul.mubr.f32.gmra.mrb[0].mxu0 %v137
    %v205 = vpop.f32.mrb[0].mxu0
    %v206 = vadd.f32 %v134, %v205
    %v207 = vpop.f32.mrb[0].mxu0
    %208 = vdwg.mxu0
    %v209 = vmax.f32 %v206, 0.0
    %v210 = vmul.f32 %v209, %v122
    %211 = vrot.lane.b32.xlu0 %v210, 1
    %v212 = vpop.permute.xlu0 %211
    %213 = vrot.lane.b32.xlu0 %v210, 127
    %v214 = vpop.permute.xlu0 %213
    %v215 = vld [vmem:[%s6] sm:$0xff]
    %v216 = vld [vmem:[%s7] sm:$0xff]
    %218 = vset.pattern.permute.xlu0 0
    %219 = vperm.xlu0 %218, %v216
    %v220 = vpop.permute.xlu0 %219
    %v223 = vsel %vm43, %v215, 0
    %225 = vmatprep.subr.mxu0 0.0
    %226 = vmatpush1.msra.mxu0 %v212
    %227 = vmatprep.subr.mxu0 0.0
    %228 = vmatpush1.msra.mxu0 %v210
    %229 = vmatprep.subr.mxu0 0.0
    %230 = vmatpush1.msra.mxu0 %v214
    %231 = vmatprep.subr.mxu0 0.0
    %232 = vmatpush1.msra.mxu0 0.0
    %233 = vmatprep.subr.mxu0 0.0
    %234 = vmatpush1.msra.mxu0 0.0
    %235 = vmatprep.subr.mxu0 0.0
    %236 = vmatpush1.msra.mxu0 0.0
    %237 = vmatprep.subr.mxu0 0.0
    %238 = vmatpush1.msra.mxu0 0.0
    %239 = vmatprep.subr.mxu0 0.0
    %240 = vmatpush1.msra.mxu0 0.0
    %241 = vmatprep.subr.mxu0 0.0
    %242 = vmatpush1.msra.mxu0 0.0
    %243 = vmatprep.subr.mxu0 0.0
    %244 = vmatpush1.msra.mxu0 0.0
    %245 = vmatprep.subr.mxu0 0.0
    %246 = vmatpush1.msra.mxu0 0.0
    %247 = vmatprep.subr.mxu0 0.0
    %248 = vmatpush1.msra.mxu0 0.0
    %249 = vmatprep.subr.mxu0 0.0
    %250 = vmatpush1.msra.mxu0 0.0
    %251 = vmatprep.subr.mxu0 0.0
    %252 = vmatpush1.msra.mxu0 0.0
    %253 = vmatprep.subr.mxu0 0.0
    %254 = vmatpush1.msra.mxu0 0.0
    %255 = vmatprep.subr.mxu0 0.0
    %256 = vmatpush1.msra.mxu0 0.0
    %257 = vmatprep.subr.mxu0 0.0
    %258 = vmatpush1.msra.mxu0 0.0
    %259 = vmatprep.subr.mxu0 0.0
    %260 = vmatpush1.msra.mxu0 0.0
    %261 = vmatprep.subr.mxu0 0.0
    %262 = vmatpush1.msra.mxu0 0.0
    %263 = vmatprep.subr.mxu0 0.0
    %264 = vmatpush1.msra.mxu0 0.0
    %265 = vmatprep.subr.mxu0 0.0
    %266 = vmatpush1.msra.mxu0 0.0
    %267 = vmatprep.subr.mxu0 0.0
    %268 = vmatpush1.msra.mxu0 0.0
    %269 = vmatprep.subr.mxu0 0.0
    %270 = vmatpush1.msra.mxu0 0.0
    %271 = vmatprep.subr.mxu0 0.0
    %272 = vmatpush1.msra.mxu0 0.0
    %273 = vmatprep.subr.mxu0 0.0
    %274 = vmatpush1.msra.mxu0 0.0
    %275 = vmatprep.subr.mxu0 0.0
    %276 = vmatpush1.msra.mxu0 0.0
    %277 = vmatprep.subr.mxu0 0.0
    %278 = vmatpush1.msra.mxu0 0.0
    %279 = vmatprep.subr.mxu0 0.0
    %280 = vmatpush1.msra.mxu0 0.0
    %281 = vmatprep.subr.mxu0 0.0
    %282 = vmatpush1.msra.mxu0 0.0
    %283 = vmatprep.subr.mxu0 0.0
    %284 = vmatpush1.msra.mxu0 0.0
    %285 = vmatprep.subr.mxu0 0.0
    %286 = vmatpush1.msra.mxu0 0.0
    %287 = vmatprep.subr.mxu0 0.0
    %288 = vmatpush1.msra.mxu0 0.0
    %289 = vmatprep.mubr.f32.mxu0 0.0
    %290 = vmatmul.mubr.f32.gmra.mrb[0].mxu0 %v223
    %v291 = vpop.f32.mrb[0].mxu0
    %v292 = vadd.f32 %v220, %v291
    %v293 = vpop.f32.mrb[0].mxu0
    %294 = vdwg.mxu0
    %v295 = vmax.f32 %v292, 0.0
    %296 = vst [vmem:[#allocation2] sm:$0xff] %v295
    // Predicated region
    $region34: #{tpu_custom_call.1} parent=1 // pred_check
      _
    $region35: #{tpu_custom_call.1} parent=1 // pred_check_branch
      %298 = sbr.rel (0) target = $region37
    $region36: #{tpu_custom_call.1} parent=1 // pred_region
      %s300 = ssub.s32 128, 128
      %301 = vsyncadd [#allocation3], %s300
      %s303 = sshll.u32 [#allocation2], 4
      %s304 = int_to_ptr.vmem [resolvable:$true] %s303
      %306 = dma.vmem_to_hbm [thread:$0]  %s304, 128, %s8, [#allocation3]
    $region37: #{tpu_custom_call.1} parent=1 // pred_fallthru
      _
    // Predicated region
    $region38: #{tpu_custom_call.1} parent=1 // pred_check
      _
    $region39: #{tpu_custom_call.1} parent=1 // pred_check_branch
      %308 = sbr.rel (0) target = $region41
    $region40: #{tpu_custom_call.1} parent=1 // pred_region
      %309 = dma.done [#allocation3], 128
    $region41: #{tpu_custom_call.1} parent=1 // pred_fallthru
      _
    %310 = vsyncpa [#allocation3], 1

// kernel: tpu_custom_call.1
$region0: #{tpu_custom_call.1}
  #allocation0 [shape = 'u32[]', space=smem, size = 0x4, offset = 0x4, fixed_abs, tag = 'smem constant byte address 0x4 - core index']
  #allocation1 [shape = 'u32[144,128]{1,0:T(1,128)}', space=vmem, size = 0x12000, scoped, tag = 'internal scratch']
  %s0 = inlined_call_operand.vmem [shape: f32[8,128], index: 0, kind: input, shape index: {}]
  %s1 = inlined_call_operand.vmem [shape: f32[1,128], index: 1, kind: input, shape index: {}]
  %s2 = inlined_call_operand.vmem [shape: f32[8,24], index: 2, kind: input, shape index: {}]
  %s3 = inlined_call_operand.vmem [shape: f32[8,1], index: 3, kind: input, shape index: {}]
  %s4 = inlined_call_operand.vmem [shape: f32[8,24], index: 4, kind: input, shape index: {}]
  %s5 = inlined_call_operand.vmem [shape: f32[8,1], index: 5, kind: input, shape index: {}]
  %s6 = inlined_call_operand.vmem [shape: f32[8,24], index: 6, kind: input, shape index: {}]
  %s7 = inlined_call_operand.vmem [shape: f32[8,1], index: 7, kind: input, shape index: {}]
  %s8 = inlined_call_operand.hbm [shape: f32[8,128], index: 8, kind: output, shape index: {}]
  %s9 = sld [smem:[#allocation0]]
  $region42: #{tpu_custom_call.1} parent=0
    _
  %s11 = ssub.s32 1, %s9
  %s12 = scalar_select 0, %s11, %s9
  $region1: #{tpu_custom_call.1} parent=0
    #allocation2 [shape = 'u8[4096]{0}', space=vmem, size = 0x1000, scoped, tag = 'output window, operand 0, single buffered']
    #allocation3 [shape = 's32[1]{0}', space=sflag, size = 0x4, scoped, tag = 'scoped memory for tpu_custom_call.1']
    %13 = vsyncpa [#allocation3], 0
    // Predicated region
    $region2: #{tpu_custom_call.1} parent=1 // pred_check
      _
    $region3: #{tpu_custom_call.1} parent=1 // pred_check_branch
      %15 = sbr.rel (0) target = $region5
    $region4: #{tpu_custom_call.1} parent=1 // pred_region
      _
    $region5: #{tpu_custom_call.1} parent=1 // pred_fallthru
      _
    // Predicated region
    $region6: #{tpu_custom_call.1} parent=1 // pred_check
      _
    $region7: #{tpu_custom_call.1} parent=1 // pred_check_branch
      %17 = sbr.rel (0) target = $region9
    $region8: #{tpu_custom_call.1} parent=1 // pred_region
      _
    $region9: #{tpu_custom_call.1} parent=1 // pred_fallthru
      _
    // Predicated region
    $region10: #{tpu_custom_call.1} parent=1 // pred_check
      _
    $region11: #{tpu_custom_call.1} parent=1 // pred_check_branch
      %19 = sbr.rel (0) target = $region13
    $region12: #{tpu_custom_call.1} parent=1 // pred_region
      _
    $region13: #{tpu_custom_call.1} parent=1 // pred_fallthru
      _
    // Predicated region
    $region14: #{tpu_custom_call.1} parent=1 // pred_check
      _
    $region15: #{tpu_custom_call.1} parent=1 // pred_check_branch
      %21 = sbr.rel (0) target = $region17
    $region16: #{tpu_custom_call.1} parent=1 // pred_region
      _
    $region17: #{tpu_custom_call.1} parent=1 // pred_fallthru
      _
    // Predicated region
    $region18: #{tpu_custom_call.1} parent=1 // pred_check
      _
    $region19: #{tpu_custom_call.1} parent=1 // pred_check_branch
      %23 = sbr.rel (0) target = $region21
    $region20: #{tpu_custom_call.1} parent=1 // pred_region
      _
    $region21: #{tpu_custom_call.1} parent=1 // pred_fallthru
      _
    // Predicated region
    $region22: #{tpu_custom_call.1} parent=1 // pred_check
      _
    $region23: #{tpu_custom_call.1} parent=1 // pred_check_branch
      %25 = sbr.rel (0) target = $region25
    $region24: #{tpu_custom_call.1} parent=1 // pred_region
      _
    $region25: #{tpu_custom_call.1} parent=1 // pred_fallthru
      _
    // Predicated region
    $region26: #{tpu_custom_call.1} parent=1 // pred_check
      _
    $region27: #{tpu_custom_call.1} parent=1 // pred_check_branch
      %27 = sbr.rel (0) target = $region29
    $region28: #{tpu_custom_call.1} parent=1 // pred_region
      _
    $region29: #{tpu_custom_call.1} parent=1 // pred_fallthru
      _
    // Predicated region
    $region30: #{tpu_custom_call.1} parent=1 // pred_check
      _
    $region31: #{tpu_custom_call.1} parent=1 // pred_check_branch
      %29 = sbr.rel (0) target = $region33
    $region32: #{tpu_custom_call.1} parent=1 // pred_region
      _
    $region33: #{tpu_custom_call.1} parent=1 // pred_fallthru
      _
    %v30 = vld [vmem:[%s1] sm:$0x1]
    %v31 = vld [vmem:[%s0] sm:$0xff]
    %32 = vrot.lane.b32.xlu0 %v31, 1
    %v33 = vpop.permute.xlu0 %32
    %34 = vrot.lane.b32.xlu0 %v31, 127
    %v35 = vpop.permute.xlu0 %34
    %v36 = vld [vmem:[%s2] sm:$0xff]
    %v37 = vld [vmem:[%s3] sm:$0xff]
    %39 = vset.pattern.permute.xlu0 0
    %40 = vperm.xlu0 %39, %v37
    %v41 = vpop.permute.xlu0 %40
    %vm43 = vcmask 195584
    %v45 = vsel %vm43, %v36, 0
    %47 = vmatprep.subr.mxu0 0.0
    %48 = vmatpush1.msra.mxu0 %v33
    %49 = vmatprep.subr.mxu0 0.0
    %50 = vmatpush1.msra.mxu0 %v31
    %51 = vmatprep.subr.mxu0 0.0
    %52 = vmatpush1.msra.mxu0 %v35
    %53 = vmatprep.subr.mxu0 0.0
    %54 = vmatpush1.msra.mxu0 0.0
    %55 = vmatprep.subr.mxu0 0.0
    %56 = vmatpush1.msra.mxu0 0.0
    %57 = vmatprep.subr.mxu0 0.0
    %58 = vmatpush1.msra.mxu0 0.0
    %59 = vmatprep.subr.mxu0 0.0
    %60 = vmatpush1.msra.mxu0 0.0
    %61 = vmatprep.subr.mxu0 0.0
    %62 = vmatpush1.msra.mxu0 0.0
    %63 = vmatprep.subr.mxu0 0.0
    %64 = vmatpush1.msra.mxu0 0.0
    %65 = vmatprep.subr.mxu0 0.0
    %66 = vmatpush1.msra.mxu0 0.0
    %67 = vmatprep.subr.mxu0 0.0
    %68 = vmatpush1.msra.mxu0 0.0
    %69 = vmatprep.subr.mxu0 0.0
    %70 = vmatpush1.msra.mxu0 0.0
    %71 = vmatprep.subr.mxu0 0.0
    %72 = vmatpush1.msra.mxu0 0.0
    %73 = vmatprep.subr.mxu0 0.0
    %74 = vmatpush1.msra.mxu0 0.0
    %75 = vmatprep.subr.mxu0 0.0
    %76 = vmatpush1.msra.mxu0 0.0
    %77 = vmatprep.subr.mxu0 0.0
    %78 = vmatpush1.msra.mxu0 0.0
    %79 = vmatprep.subr.mxu0 0.0
    %80 = vmatpush1.msra.mxu0 0.0
    %81 = vmatprep.subr.mxu0 0.0
    %82 = vmatpush1.msra.mxu0 0.0
    %83 = vmatprep.subr.mxu0 0.0
    %84 = vmatpush1.msra.mxu0 0.0
    %85 = vmatprep.subr.mxu0 0.0
    %86 = vmatpush1.msra.mxu0 0.0
    %87 = vmatprep.subr.mxu0 0.0
    %88 = vmatpush1.msra.mxu0 0.0
    %89 = vmatprep.subr.mxu0 0.0
    %90 = vmatpush1.msra.mxu0 0.0
    %91 = vmatprep.subr.mxu0 0.0
    %92 = vmatpush1.msra.mxu0 0.0
    %93 = vmatprep.subr.mxu0 0.0
    %94 = vmatpush1.msra.mxu0 0.0
    %95 = vmatprep.subr.mxu0 0.0
    %96 = vmatpush1.msra.mxu0 0.0
    %97 = vmatprep.subr.mxu0 0.0
    %98 = vmatpush1.msra.mxu0 0.0
    %99 = vmatprep.subr.mxu0 0.0
    %100 = vmatpush1.msra.mxu0 0.0
    %101 = vmatprep.subr.mxu0 0.0
    %102 = vmatpush1.msra.mxu0 0.0
    %103 = vmatprep.subr.mxu0 0.0
    %104 = vmatpush1.msra.mxu0 0.0
    %105 = vmatprep.subr.mxu0 0.0
    %106 = vmatpush1.msra.mxu0 0.0
    %107 = vmatprep.subr.mxu0 0.0
    %108 = vmatpush1.msra.mxu0 0.0
    %109 = vmatprep.subr.mxu0 0.0
    %110 = vmatpush1.msra.mxu0 0.0
    %111 = vmatprep.mubr.f32.mxu0 0.0
    %112 = vmatmul.mubr.f32.gmra.mrb[0].mxu0 %v45
    %v113 = vpop.f32.mrb[0].mxu0
    %v114 = vadd.f32 %v41, %v113
    %v115 = vpop.f32.mrb[0].mxu0
    %116 = vdwg.mxu0
    %v117 = vmax.f32 %v114, 0.0
    %v119 = vlaneseq
    %v120 = vshrl.u32 %v119, 7
    %v121 = vsub.s32 0, %v120
    %v122 = vrot.slane %v30, %v121
    %v124 = vmul.f32 %v117, %v122
    %125 = vrot.lane.b32.xlu0 %v124, 1
    %v126 = vpop.permute.xlu0 %125
    %127 = vrot.lane.b32.xlu0 %v124, 127
    %v128 = vpop.permute.xlu0 %127
    %v129 = vld [vmem:[%s4] sm:$0xff]
    %v130 = vld [vmem:[%s5] sm:$0xff]
    %132 = vset.pattern.permute.xlu0 0
    %133 = vperm.xlu0 %132, %v130
    %v134 = vpop.permute.xlu0 %133
    %v137 = vsel %vm43, %v129, 0
    %139 = vmatprep.subr.mxu0 0.0
    %140 = vmatpush1.msra.mxu0 %v126
    %141 = vmatprep.subr.mxu0 0.0
    %142 = vmatpush1.msra.mxu0 %v124
    %143 = vmatprep.subr.mxu0 0.0
    %144 = vmatpush1.msra.mxu0 %v128
    %145 = vmatprep.subr.mxu0 0.0
    %146 = vmatpush1.msra.mxu0 0.0
    %147 = vmatprep.subr.mxu0 0.0
    %148 = vmatpush1.msra.mxu0 0.0
    %149 = vmatprep.subr.mxu0 0.0
    %150 = vmatpush1.msra.mxu0 0.0
    %151 = vmatprep.subr.mxu0 0.0
    %152 = vmatpush1.msra.mxu0 0.0
    %153 = vmatprep.subr.mxu0 0.0
    %154 = vmatpush1.msra.mxu0 0.0
    %155 = vmatprep.subr.mxu0 0.0
    %156 = vmatpush1.msra.mxu0 0.0
    %157 = vmatprep.subr.mxu0 0.0
    %158 = vmatpush1.msra.mxu0 0.0
    %159 = vmatprep.subr.mxu0 0.0
    %160 = vmatpush1.msra.mxu0 0.0
    %161 = vmatprep.subr.mxu0 0.0
    %162 = vmatpush1.msra.mxu0 0.0
    %163 = vmatprep.subr.mxu0 0.0
    %164 = vmatpush1.msra.mxu0 0.0
    %165 = vmatprep.subr.mxu0 0.0
    %166 = vmatpush1.msra.mxu0 0.0
    %167 = vmatprep.subr.mxu0 0.0
    %168 = vmatpush1.msra.mxu0 0.0
    %169 = vmatprep.subr.mxu0 0.0
    %170 = vmatpush1.msra.mxu0 0.0
    %171 = vmatprep.subr.mxu0 0.0
    %172 = vmatpush1.msra.mxu0 0.0
    %173 = vmatprep.subr.mxu0 0.0
    %174 = vmatpush1.msra.mxu0 0.0
    %175 = vmatprep.subr.mxu0 0.0
    %176 = vmatpush1.msra.mxu0 0.0
    %177 = vmatprep.subr.mxu0 0.0
    %178 = vmatpush1.msra.mxu0 0.0
    %179 = vmatprep.subr.mxu0 0.0
    %180 = vmatpush1.msra.mxu0 0.0
    %181 = vmatprep.subr.mxu0 0.0
    %182 = vmatpush1.msra.mxu0 0.0
    %183 = vmatprep.subr.mxu0 0.0
    %184 = vmatpush1.msra.mxu0 0.0
    %185 = vmatprep.subr.mxu0 0.0
    %186 = vmatpush1.msra.mxu0 0.0
    %187 = vmatprep.subr.mxu0 0.0
    %188 = vmatpush1.msra.mxu0 0.0
    %189 = vmatprep.subr.mxu0 0.0
    %190 = vmatpush1.msra.mxu0 0.0
    %191 = vmatprep.subr.mxu0 0.0
    %192 = vmatpush1.msra.mxu0 0.0
    %193 = vmatprep.subr.mxu0 0.0
    %194 = vmatpush1.msra.mxu0 0.0
    %195 = vmatprep.subr.mxu0 0.0
    %196 = vmatpush1.msra.mxu0 0.0
    %197 = vmatprep.subr.mxu0 0.0
    %198 = vmatpush1.msra.mxu0 0.0
    %199 = vmatprep.subr.mxu0 0.0
    %200 = vmatpush1.msra.mxu0 0.0
    %201 = vmatprep.subr.mxu0 0.0
    %202 = vmatpush1.msra.mxu0 0.0
    %203 = vmatprep.mubr.f32.mxu0 0.0
    %204 = vmatmul.mubr.f32.gmra.mrb[0].mxu0 %v137
    %v205 = vpop.f32.mrb[0].mxu0
    %v206 = vadd.f32 %v134, %v205
    %v207 = vpop.f32.mrb[0].mxu0
    %208 = vdwg.mxu0
    %v209 = vmax.f32 %v206, 0.0
    %v210 = vmul.f32 %v209, %v122
    %211 = vrot.lane.b32.xlu0 %v210, 1
    %v212 = vpop.permute.xlu0 %211
    %213 = vrot.lane.b32.xlu0 %v210, 127
    %v214 = vpop.permute.xlu0 %213
    %v215 = vld [vmem:[%s6] sm:$0xff]
    %v216 = vld [vmem:[%s7] sm:$0xff]
    %218 = vset.pattern.permute.xlu0 0
    %219 = vperm.xlu0 %218, %v216
    %v220 = vpop.permute.xlu0 %219
    %v223 = vsel %vm43, %v215, 0
    %225 = vmatprep.subr.mxu0 0.0
    %226 = vmatpush1.msra.mxu0 %v212
    %227 = vmatprep.subr.mxu0 0.0
    %228 = vmatpush1.msra.mxu0 %v210
    %229 = vmatprep.subr.mxu0 0.0
    %230 = vmatpush1.msra.mxu0 %v214
    %231 = vmatprep.subr.mxu0 0.0
    %232 = vmatpush1.msra.mxu0 0.0
    %233 = vmatprep.subr.mxu0 0.0
    %234 = vmatpush1.msra.mxu0 0.0
    %235 = vmatprep.subr.mxu0 0.0
    %236 = vmatpush1.msra.mxu0 0.0
    %237 = vmatprep.subr.mxu0 0.0
    %238 = vmatpush1.msra.mxu0 0.0
    %239 = vmatprep.subr.mxu0 0.0
    %240 = vmatpush1.msra.mxu0 0.0
    %241 = vmatprep.subr.mxu0 0.0
    %242 = vmatpush1.msra.mxu0 0.0
    %243 = vmatprep.subr.mxu0 0.0
    %244 = vmatpush1.msra.mxu0 0.0
    %245 = vmatprep.subr.mxu0 0.0
    %246 = vmatpush1.msra.mxu0 0.0
    %247 = vmatprep.subr.mxu0 0.0
    %248 = vmatpush1.msra.mxu0 0.0
    %249 = vmatprep.subr.mxu0 0.0
    %250 = vmatpush1.msra.mxu0 0.0
    %251 = vmatprep.subr.mxu0 0.0
    %252 = vmatpush1.msra.mxu0 0.0
    %253 = vmatprep.subr.mxu0 0.0
    %254 = vmatpush1.msra.mxu0 0.0
    %255 = vmatprep.subr.mxu0 0.0
    %256 = vmatpush1.msra.mxu0 0.0
    %257 = vmatprep.subr.mxu0 0.0
    %258 = vmatpush1.msra.mxu0 0.0
    %259 = vmatprep.subr.mxu0 0.0
    %260 = vmatpush1.msra.mxu0 0.0
    %261 = vmatprep.subr.mxu0 0.0
    %262 = vmatpush1.msra.mxu0 0.0
    %263 = vmatprep.subr.mxu0 0.0
    %264 = vmatpush1.msra.mxu0 0.0
    %265 = vmatprep.subr.mxu0 0.0
    %266 = vmatpush1.msra.mxu0 0.0
    %267 = vmatprep.subr.mxu0 0.0
    %268 = vmatpush1.msra.mxu0 0.0
    %269 = vmatprep.subr.mxu0 0.0
    %270 = vmatpush1.msra.mxu0 0.0
    %271 = vmatprep.subr.mxu0 0.0
    %272 = vmatpush1.msra.mxu0 0.0
    %273 = vmatprep.subr.mxu0 0.0
    %274 = vmatpush1.msra.mxu0 0.0
    %275 = vmatprep.subr.mxu0 0.0
    %276 = vmatpush1.msra.mxu0 0.0
    %277 = vmatprep.subr.mxu0 0.0
    %278 = vmatpush1.msra.mxu0 0.0
    %279 = vmatprep.subr.mxu0 0.0
    %280 = vmatpush1.msra.mxu0 0.0
    %281 = vmatprep.subr.mxu0 0.0
    %282 = vmatpush1.msra.mxu0 0.0
    %283 = vmatprep.subr.mxu0 0.0
    %284 = vmatpush1.msra.mxu0 0.0
    %285 = vmatprep.subr.mxu0 0.0
    %286 = vmatpush1.msra.mxu0 0.0
    %287 = vmatprep.subr.mxu0 0.0
    %288 = vmatpush1.msra.mxu0 0.0
    %289 = vmatprep.mubr.f32.mxu0 0.0
    %290 = vmatmul.mubr.f32.gmra.mrb[0].mxu0 %v223
    %v291 = vpop.f32.mrb[0].mxu0
    %v292 = vadd.f32 %v220, %v291
    %v293 = vpop.f32.mrb[0].mxu0
    %294 = vdwg.mxu0
    %v295 = vmax.f32 %v292, 0.0
    %296 = vst [vmem:[#allocation2] sm:$0xff] %v295
    // Predicated region
    $region34: #{tpu_custom_call.1} parent=1 // pred_check
      _
    $region35: #{tpu_custom_call.1} parent=1 // pred_check_branch
      %298 = sbr.rel (0) target = $region37
    $region36: #{tpu_custom_call.1} parent=1 // pred_region
      %s300 = ssub.s32 128, 128
      %301 = vsyncadd [#allocation3], %s300
      %s303 = sshll.u32 [#allocation2], 4
      %s304 = int_to_ptr.vmem [resolvable:$true] %s303
      %306 = dma.vmem_to_hbm [thread:$0]  %s304, 128, %s8, [#allocation3]
    $region37: #{tpu_custom_call.1} parent=1 // pred_fallthru
      _
    // Predicated region
    $region38: #{tpu_custom_call.1} parent=1 // pred_check
      _
    $region39: #{tpu_custom_call.1} parent=1 // pred_check_branch
      %308 = sbr.rel (0) target = $region41
    $region40: #{tpu_custom_call.1} parent=1 // pred_region
      %309 = dma.done [#allocation3], 128
    $region41: #{tpu_custom_call.1} parent=1 // pred_fallthru
      _
    %310 = vsyncpa [#allocation3], 1

</llo_original>
